<compile_context>
chip_gen: v5e
topology: v5e:2x2
jax: 0.10.0
libtpu: 0.0.40
codegen_flags: <defaults>
</compile_context>

<pallas_src>
from functools import partial

import jax
import jax.numpy as jnp
from jax.experimental import pallas as pl
from jax.experimental.pallas import tpu as pltpu


def dain_shift_kernel(x_ref, wt_ref, o_ref, *, inv_time):
    # x_ref:  (TB, F, T) input tile
    # wt_ref: (F, F) pre-transposed shift weight (== W^T of the nn.Linear)
    x = x_ref[...]                                            # (TB, F, T), input dtype
    # Mean over time, accumulated in f32 (no full-tile f32 copy is materialized).
    feat_avg = jnp.sum(x, axis=-1, dtype=jnp.float32) * inv_time   # (TB, F)
    # nn.Linear (no bias): shifter = feat_avg @ W^T  ==  feat_avg @ wt
    shifter = jnp.dot(feat_avg, wt_ref[...].astype(jnp.float32),
                      preferred_element_type=jnp.float32)     # (TB, F)
    # Single explicit broadcast (lane-wise) of the per-(batch,feat) shift.
    shifter_b = jnp.broadcast_to(
        shifter.astype(o_ref.dtype)[:, :, None], o_ref.shape)
    o_ref[...] = x - shifter_b


def _chip_budgets():
    """Generation-gated per-buffer tile budget / VMEM limit / TC count."""
    try:
        info = pltpu.get_tpu_info()
        vmem_cap = int(getattr(info, "vmem_capacity_bytes", 64 * 1024 * 1024))
    except Exception:
        vmem_cap = 64 * 1024 * 1024  # conservative (v7x-like) fallback
    if vmem_cap >= 128 * 1024 * 1024:
        # v5e / v6e: 128 MiB VMEM, single TensorCore -> big tiles, no batch split.
        return 12 * 1024 * 1024, 80 * 1024 * 1024, 1
    # v7x: 64 MiB physical VMEM, 2 TensorCores share HBM.
    return 6 * 1024 * 1024, 30 * 1024 * 1024, 2


def _pick_tb(B, bytes_per_batch_row, max_tile_bytes, num_tensorcores):
    """Largest divisor of B whose tile fits the budget; on multi-TC chips
    prefer an even split of grid steps across TensorCores."""
    cap = max(1, max_tile_bytes // max(1, bytes_per_batch_row))
    divisors = [d for d in range(1, B + 1) if B % d == 0]
    fitting = [d for d in divisors if d <= cap] or [1]
    if num_tensorcores > 1 and B > 1:
        balanced = [d for d in fitting if (B // d) % num_tensorcores == 0]
        if balanced:
            return max(balanced)
        multi = [d for d in fitting if (B // d) >= num_tensorcores]
        if multi:
            return max(multi)
    return max(fitting)


def adaptive_input_norm(inputs, shift_weight):
    """inputs: (B, F, T); shift_weight: (F, F) PyTorch Linear weight -> (B, F, T)."""
    B, F, T = inputs.shape
    assert shift_weight.shape == (F, F)

    max_tile_bytes, vmem_limit_bytes, num_tcs = _chip_budgets()

    itemsize = jnp.dtype(inputs.dtype).itemsize
    bytes_per_batch_row = F * T * itemsize
    tb = _pick_tb(B, bytes_per_batch_row, max_tile_bytes, num_tcs)
    num_blocks = B // tb  # tb divides B: no dead batch padding
    # TODO(synk): if a single (F, T) slice exceeds the VMEM budget (very large
    # F*T), tb clamps to 1 but the tile can still blow vmem_limit_bytes; a
    # two-pass reduce + subtract fallback would be needed for that regime.

    # Pre-transpose once in the wrapper so the kernel does a plain matmul.
    w_t = shift_weight.T

    kernel = partial(dain_shift_kernel, inv_time=1.0 / T)

    # Note: input_output_aliases={0: 0} would drop the separate output
    # allocation, but the caller here reuses `inputs`, so we keep it unaliased.
    out = pl.pallas_call(
        kernel,
        out_shape=jax.ShapeDtypeStruct((B, F, T), inputs.dtype),
        grid_spec=pl.GridSpec(
            grid=(num_blocks,),
            in_specs=[
                # Full-extent (F, T) in the last two dims: exempt from the
                # (8,128) divisibility rule, no padding round trips.
                pl.BlockSpec((tb, F, T), lambda b: (b, 0, 0)),
                pl.BlockSpec((F, F), lambda b: (0, 0)),  # weight stays resident
            ],
            out_specs=pl.BlockSpec((tb, F, T), lambda b: (b, 0, 0)),
        ),
        compiler_params=pltpu.CompilerParams(
            dimension_semantics=("parallel",),
            vmem_limit_bytes=vmem_limit_bytes,
        ),
    )(inputs, w_t)

    return out


if __name__ == "__main__":
    B, F, T = 2, 32, 16  # batch, feat_dim, time (seq)
    key = jax.random.PRNGKey(0)
    k_x, k_shift, k_scale, k_gate_w, k_gate_b = jax.random.split(key, 5)

    x = jax.random.normal(k_x, (B, F, T), dtype=jnp.float32)

    # Deterministic parameter init (shapes per __init__: three F x F Linears).
    bound = 1.0 / (F ** 0.5)
    shift_w = jax.random.uniform(k_shift, (F, F), jnp.float32, -bound, bound)
    scale_w = jax.random.uniform(k_scale, (F, F), jnp.float32, -bound, bound)   # unused in forward
    gate_w = jax.random.uniform(k_gate_w, (F, F), jnp.float32, -bound, bound)   # unused in forward
    gate_b = jax.random.uniform(k_gate_b, (F,), jnp.float32, -bound, bound)     # unused in forward
    # TODO(synk): scale/gate branches exist in __init__ but the reference
    # forward never uses them, so they are not part of the kernel.

    out = adaptive_input_norm(x, shift_w)
    out = jax.block_until_ready(out)

    # Pure-JAX reference for sanity.
    feat_avg = x.mean(axis=2)                      # (B, F)
    shifter = feat_avg @ shift_w.T                 # (B, F)
    ref = x - shifter[:, :, None]
    assert out.shape == ref.shape, "shape mismatch vs reference"
    assert jnp.allclose(out, ref, atol=1e-5, rtol=1e-5), "mismatch vs reference"

    print("KERNEL_OK")
</pallas_src>

<mosaic_0001>
module attributes {stable_mosaic.version = 11 : i64} {
  func.func @dain_shift_kernel(%arg0: i32, %arg1: memref<1x32x16xf32, #tpu.memory_space<vmem>>, %arg2: memref<32x32xf32, #tpu.memory_space<vmem>>, %arg3: memref<1x32x16xf32, #tpu.memory_space<vmem>>) attributes {dimension_semantics = [#tpu.dimension_semantics<parallel>], iteration_bounds = array<i64: 2>, scalar_prefetch = 0 : i64, scratch_operands = 0 : i64, tpu.core_type = #tpu.core_type<tc>, window_params = [{transform_indices = @transform_0, window_bounds = array<i64: 1, 32, 16>}, {pipeline_mode = #tpu.pipeline_mode<synchronous>, transform_indices = @transform_1, window_bounds = array<i64: 32, 32>}, {transform_indices = @transform_2, window_bounds = array<i64: 1, 32, 16>}]} {
    %c0 = arith.constant 0 : index
    %c0_0 = arith.constant 0 : index
    %c0_1 = arith.constant 0 : index
    %0 = vector.load %arg1[%c0, %c0_0, %c0_1] : memref<1x32x16xf32, #tpu.memory_space<vmem>>, vector<1x32x16xf32>
    %cst = arith.constant dense<0.000000e+00> : vector<1x32xf32>
    %1 = vector.multi_reduction <add>, %0, %cst [2] : vector<1x32x16xf32> to vector<1x32xf32>
    %cst_2 = arith.constant 6.250000e-02 : f32
    %2 = vector.broadcast %cst_2 : f32 to vector<1x32xf32>
    %3 = arith.mulf %1, %2 : vector<1x32xf32>
    %c0_3 = arith.constant 0 : index
    %c0_4 = arith.constant 0 : index
    %4 = vector.load %arg2[%c0_3, %c0_4] : memref<32x32xf32, #tpu.memory_space<vmem>>, vector<32x32xf32>
    %cst_5 = arith.constant dense<0.000000e+00> : vector<1x32xf32>
    %5 = tpu.matmul %3, %4, %cst_5 {dimension_numbers = #tpu.dot_dimension_numbers<[1], [0], [0], [1], [0, 0, 1, 1], [], []>} : vector<1x32xf32>, vector<32x32xf32>, vector<1x32xf32> -> vector<1x32xf32>
    %6 = vector.shape_cast %5 : vector<1x32xf32> to vector<1x32x1xf32>
    %7 = vector.shape_cast %6 : vector<1x32x1xf32> to vector<1x32x1xf32>
    %8 = vector.broadcast %7 : vector<1x32x1xf32> to vector<1x32x16xf32>
    %9 = arith.subf %0, %8 : vector<1x32x16xf32>
    %c0_6 = arith.constant 0 : index
    %c0_7 = arith.constant 0 : index
    %c0_8 = arith.constant 0 : index
    %10 = vector.load %arg3[%c0_6, %c0_7, %c0_8] : memref<1x32x16xf32, #tpu.memory_space<vmem>>, vector<1x32x16xf32>
    tpu.vector_store %arg3[%c0_6, %c0_7, %c0_8], %9 {strides = array<i32>} : memref<1x32x16xf32, #tpu.memory_space<vmem>>, vector<1x32x16xf32>,
    return
  }
  func.func @transform_0(%arg0: i32) -> (i32, i32, i32) {
    %c0_i32 = arith.constant 0 : i32
    %c0_i32_0 = arith.constant 0 : i32
    %c0_i32_1 = arith.constant 0 : i32
    return %arg0, %c0_i32, %c0_i32_0 : i32, i32, i32
  }
  func.func @transform_1(%arg0: i32) -> (i32, i32) {
    %c0_i32 = arith.constant 0 : i32
    %c0_i32_0 = arith.constant 0 : i32
    %c0_i32_1 = arith.constant 0 : i32
    return %c0_i32, %c0_i32_0 : i32, i32
  }
  func.func @transform_2(%arg0: i32) -> (i32, i32, i32) {
    %c0_i32 = arith.constant 0 : i32
    %c0_i32_0 = arith.constant 0 : i32
    %c0_i32_1 = arith.constant 0 : i32
    return %arg0, %c0_i32, %c0_i32_0 : i32, i32, i32
  }
}

</mosaic_0001>

<llo_original>
// kernel: tpu_custom_call.1
$region0: #{tpu_custom_call.1}
  #allocation0 [shape = 'u32[]', space=smem, size = 0x4, offset = 0x4, fixed_abs, tag = 'smem constant byte address 0x4 - core index']
  #allocation1 [shape = 'u32[72,128]{1,0:T(1,128)}', space=vmem, size = 0x9000, scoped, tag = 'internal scratch']
  %s0 = inlined_call_operand.vmem [shape: f32[2,32,16], index: 0, kind: input, shape index: {}]
  %s1 = inlined_call_operand.vmem [shape: f32[32,32], index: 1, kind: input, shape index: {}]
  %s2 = inlined_call_operand.vmem [shape: f32[2,32,16], index: 2, kind: output, shape index: {}]
  %s3 = sld [smem:[#allocation0]]
  $region41: #{tpu_custom_call.1} parent=0
    _
  %s5 = ssub.s32 1, %s3
  %s6 = scalar_select 0, %s5, %s3
  loop: start=0, step=1, limit=4
  $region2: #{tpu_custom_call.1} parent=0 // loop_pre_header
    _
  $region3: #{tpu_custom_call.1} parent=0 // loop_header
    %s8 = sphi 0, %s12
    %p9 = scmp.ge.s32.totalorder %s8, 4
    %s18 = sphi 0, %s20
    %s21 = sphi 0, %s18
    %s22 = sphi 0, %s21
    %s38 = sphi 0, %s22
    %s42 = sphi 0, %s42
    %s44 = sphi 0, %s42
    %s45 = sphi 0, %s44
    %s59 = sphi 0, %s45
    %s65 = sphi 0, %s67
    %s68 = sphi 0, %s65
    %s69 = sphi 0, %s68
    %s85 = sphi 0, %s69
  $region4: #{tpu_custom_call.1} parent=0 // loop_header_branch
    %11 = sbr.rel (%p9) target = $region8
  $region5: #{tpu_custom_call.1} parent=0 // loop_body
    %s13 = ssub.s32 %s8, 1
    %s14 = ssub.s32 %s8, 2
    %s15 = sadd.s32 %s8, 1
    %s16 = ssub.s32 %s8, %s15
    %p17 = scmp.eq.s32.totalorder %s16, 0
    %s19 = sadd.s32 %s18, 1
    %s20 = scalar_select %p17, %s18, %s19
    %p23 = pneg %p17
    %p24 = scmp.eq.s32.totalorder %s8, 1
    %p25 = por %p23, %p24
    %p26 = scmp.ne.s32.totalorder %s18, %s21
    %p27 = scmp.eq.s32.totalorder %s8, 0
    %p28 = por %p26, %p27
    %p29 = scmp.ne.s32.totalorder %s18, %s21
    %p30 = scmp.eq.s32.totalorder %s13, 1
    %p31 = por %p29, %p30
    %p32 = scmp.ne.s32.totalorder %s21, %s22
    %p33 = scmp.eq.s32.totalorder %s13, 0
    %p34 = por %p32, %p33
    %p35 = scmp.ne.s32.totalorder %s21, %s22
    %p36 = scmp.eq.s32.totalorder %s14, 1
    %p37 = por %p35, %p36
    %p39 = scmp.ne.s32.totalorder %s22, %s38
    %p40 = scmp.eq.s32.totalorder %s14, 0
    %p41 = por %p39, %p40
    %s43 = sadd.s32 %s42, 1
    %p46 = scmp.eq.s32.totalorder %s8, 1
    %p47 = scmp.ne.s32.totalorder %s42, %s44
    %p48 = scmp.eq.s32.totalorder %s8, 0
    %p49 = por %p47, %p48
    %p50 = scmp.ne.s32.totalorder %s42, %s44
    %p51 = scmp.eq.s32.totalorder %s13, 1
    %p52 = por %p50, %p51
    %p53 = scmp.ne.s32.totalorder %s44, %s45
    %p54 = scmp.eq.s32.totalorder %s13, 0
    %p55 = por %p53, %p54
    %p56 = scmp.ne.s32.totalorder %s44, %s45
    %p57 = scmp.eq.s32.totalorder %s14, 1
    %p58 = por %p56, %p57
    %p60 = scmp.ne.s32.totalorder %s45, %s59
    %p61 = scmp.eq.s32.totalorder %s14, 0
    %p62 = por %p60, %p61
    %s63 = ssub.s32 %s8, %s15
    %p64 = scmp.eq.s32.totalorder %s63, 0
    %s66 = sadd.s32 %s65, 1
    %s67 = scalar_select %p64, %s65, %s66
    %p70 = pneg %p64
    %p71 = scmp.eq.s32.totalorder %s8, 1
    %p72 = por %p70, %p71
    %p73 = scmp.ne.s32.totalorder %s65, %s68
    %p74 = scmp.eq.s32.totalorder %s8, 0
    %p75 = por %p73, %p74
    %p76 = scmp.ne.s32.totalorder %s65, %s68
    %p77 = scmp.eq.s32.totalorder %s13, 1
    %p78 = por %p76, %p77
    %p79 = scmp.ne.s32.totalorder %s68, %s69
    %p80 = scmp.eq.s32.totalorder %s13, 0
    %p81 = por %p79, %p80
    %p82 = scmp.ne.s32.totalorder %s68, %s69
    %p83 = scmp.eq.s32.totalorder %s14, 1
    %p84 = por %p82, %p83
    %p86 = scmp.ne.s32.totalorder %s69, %s85
    %p87 = scmp.eq.s32.totalorder %s14, 0
    %p88 = por %p86, %p87
    %p89 = scmp.le.s32.totalorder 1, %s8
    %p90 = scmp.lt.s32.totalorder %s8, 3
    %p91 = pnand %p89, %p90
    %p92 = pneg %p91
    // Predicated region
    $region9: #{tpu_custom_call.1} parent=5 // pred_check
      _
    $region10: #{tpu_custom_call.1} parent=5 // pred_check_branch
      %94 = sbr.rel (%p91) target = $region12
    $region11: #{tpu_custom_call.1} parent=5 // pred_region
      %s95 = ssub.s32 %s8, 1
      // Predicated region
      $region13: #{tpu_custom_call.1} parent=11 // pred_check
        %p96 = pneg %p55
      $region14: #{tpu_custom_call.1} parent=11 // pred_check_branch
        %98 = sbr.rel (%p96) target = $region16
      $region15: #{tpu_custom_call.1} parent=11 // pred_region
        _
      $region16: #{tpu_custom_call.1} parent=11 // pred_fallthru
        _
    $region12: #{tpu_custom_call.1} parent=5 // pred_fallthru
      _
    %p99 = scmp.lt.s32.totalorder %s8, 2
    // Predicated region
    $region17: #{tpu_custom_call.1} parent=5 // pred_check
      %p100 = pneg %p99
    $region18: #{tpu_custom_call.1} parent=5 // pred_check_branch
      %102 = sbr.rel (%p100) target = $region20
    $region19: #{tpu_custom_call.1} parent=5 // pred_region
      // Predicated region
      $region21: #{tpu_custom_call.1} parent=19 // pred_check
        %p103 = pneg %p28
      $region22: #{tpu_custom_call.1} parent=19 // pred_check_branch
        %105 = sbr.rel (%p103) target = $region24
      $region23: #{tpu_custom_call.1} parent=19 // pred_region
        %p106 = scmp.lt.s32.totalorder %s8, 1
        %s107 = scalar_select %p106, %s8, 1
        %s108 = smul.addr %s107, 4
        %s109 = smul.addr %s108, 8
        %s110 = scalar_lea.vmem %s0, %s109
      $region24: #{tpu_custom_call.1} parent=19 // pred_fallthru
        _
    $region20: #{tpu_custom_call.1} parent=5 // pred_fallthru
      _
    %p111 = scmp.le.s32.totalorder 1, %s8
    %p112 = scmp.lt.s32.totalorder %s8, 3
    %p113 = pnand %p111, %p112
    %p114 = pneg %p113
    // Predicated region
    $region25: #{tpu_custom_call.1} parent=5 // pred_check
      _
    $region26: #{tpu_custom_call.1} parent=5 // pred_check_branch
      %116 = sbr.rel (%p113) target = $region28
    $region27: #{tpu_custom_call.1} parent=5 // pred_region
      %s117 = ssub.s32 %s8, 1
      %p118 = scmp.lt.s32.totalorder %s13, 1
      %s119 = scalar_select %p118, %s13, 1
      %s120 = smul.addr %s119, 4
      %s121 = smul.addr %s120, 8
      %s122 = scalar_lea.vmem %s0, %s121
      %p123 = pneg %p34
      %p124 = pneg %p31
      %p125 = pneg %p55
      %p126 = pneg %p52
      %p127 = pneg %p81
      %p128 = pneg %p78
      %p129 = scmp.lt.s32.totalorder %s13, 1
      %s130 = scalar_select %p129, %s13, 1
      %s131 = smul.addr %s130, 4
      %s132 = smul.addr %s131, 8
      %s133 = scalar_lea.vmem %s2, %s132
      %p134 = scmp.lt.s32.totalorder %s13, 1
      %s135 = scalar_select %p134, %s13, 1
      %s136 = smul.addr %s135, 4
      %s137 = smul.addr %s136, 8
      %s138 = scalar_lea.vmem %s0, %s137
      %p139 = scmp.lt.s32.totalorder %s13, 1
      %s140 = scalar_select %p139, %s13, 1
      %s141 = smul.addr %s140, 4
      %s142 = smul.addr %s141, 8
      %s143 = scalar_lea.vmem %s2, %s142
      %v144 = vld [vmem:[%s138] sm:$0xff]
      %v145 = vld [vmem:[%s138 + $0x8] sm:$0xff]
      %v146 = vld [vmem:[%s138 + $0x10] sm:$0xff]
      %v147 = vld [vmem:[%s138 + $0x18] sm:$0xff]
      %vm148 = vcmask 130048
      %v149 = vsel %vm148, %v144, 0.0
      %150 = vadd.xlane.f32.xlu0 %v149
      %v151 = vpop.xlane.xlu0 %150
      %v152 = vsel %vm148, %v145, 0.0
      %153 = vadd.xlane.f32.xlu0 %v152
      %v154 = vpop.xlane.xlu0 %153
      %v155 = vsel %vm148, %v146, 0.0
      %156 = vadd.xlane.f32.xlu0 %v155
      %v157 = vpop.xlane.xlu0 %156
      %v158 = vsel %vm148, %v147, 0.0
      %159 = vadd.xlane.f32.xlu0 %v158
      %v160 = vpop.xlane.xlu0 %159
      %v161 = vmul.f32 %v151, 0.0625
      %v162 = vmul.f32 %v154, 0.0625
      %v163 = vmul.f32 %v157, 0.0625
      %v164 = vmul.f32 %v160, 0.0625
      %v165 = vld [vmem:[%s1] sm:$0xff]
      %v166 = vld [vmem:[%s1 + $0x8] sm:$0xff]
      %v167 = vld [vmem:[%s1 + $0x10] sm:$0xff]
      %v168 = vld [vmem:[%s1 + $0x18] sm:$0xff]
      %v173 = vlaneseq
      %v174 = vand.u32 %v173, 127
      %v175 = vperm.slane %v161, %v174
      %v176 = vadd.s32 %v174, 4294967288
      %v177 = vperm.slane %v162, %v176
      %vm178 = vcmask 130112
      %v179 = vsel %vm178, %v177, %v175
      %v180 = vadd.s32 %v174, 4294967280
      %v181 = vperm.slane %v163, %v180
      %vm182 = vcmask 195712
      %v183 = vsel %vm182, %v181, %v179
      %v184 = vadd.s32 %v174, 4294967272
      %v185 = vperm.slane %v164, %v184
      %vm186 = vcmask 261312
      %v187 = vsel %vm186, %v185, %v183
      %vm188 = vcmask 261120
      %v189 = vsel %vm188, %v187, 0
      %191 = vmatpush.msra.mxu0 0.0
      %192 = vmatpush.msra.mxu0 0.0
      %193 = vmatpush.msra.mxu0 0.0
      %194 = vmatpush.msra.mxu0 0.0
      %195 = vmatpush.msra.mxu0 0.0
      %196 = vmatpush.msra.mxu0 0.0
      %197 = vmatpush.msra.mxu0 0.0
      %198 = vmatpush.msra.mxu0 0.0
      %199 = vmatpush.msra.mxu0 0.0
      %200 = vmatpush.msra.mxu0 0.0
      %201 = vmatpush.msra.mxu0 0.0
      %202 = vmatpush.msra.mxu0 0.0
      %203 = vmatpush.msra.mxu0 %v168
      %204 = vmatpush.msra.mxu0 %v167
      %205 = vmatpush.msra.mxu0 %v166
      %206 = vmatpush.msra.mxu0 %v165
      %207 = vmatmul.f32.gmra.mxu0 %v189
      %v208 = vpop.f32.mrf.mxu0
      %v209 = vadd.f32 0.0, %v208
      %210 = vdwg.mxu0
      %v211 = vperm.slane %v209, 0
      %v212 = vlaneseq
      %v213 = vshrl.u32 %v212, 7
      %215 = vset.pattern.permute.xlu0 %v213
      %216 = vperm.xlu0 %215, %v211
      %v217 = vpop.permute.xlu0 %216
      %v218 = vlaneseq
      %v219 = vshrl.u32 %v218, 7
      %v220 = vadd.s32 %v219, 8
      %221 = vset.pattern.permute.xlu0 %v220
      %222 = vperm.xlu0 %221, %v211
      %v223 = vpop.permute.xlu0 %222
      %v224 = vlaneseq
      %v225 = vshrl.u32 %v224, 7
      %v226 = vadd.s32 %v225, 16
      %227 = vset.pattern.permute.xlu0 %v226
      %228 = vperm.xlu0 %227, %v211
      %v229 = vpop.permute.xlu0 %228
      %v230 = vlaneseq
      %v231 = vshrl.u32 %v230, 7
      %v232 = vadd.s32 %v231, 24
      %233 = vset.pattern.permute.xlu0 %v232
      %234 = vperm.xlu0 %233, %v211
      %v235 = vpop.permute.xlu0 %234
      %v236 = vsub.f32 %v144, %v217
      %v237 = vsub.f32 %v145, %v223
      %v238 = vsub.f32 %v146, %v229
      %v239 = vsub.f32 %v147, %v235
      %240 = vst.msk [vmem:[%s143] sm:$0xff] %vm148, %v236
      %241 = vst.msk [vmem:[%s143 + $0x8] sm:$0xff] %vm148, %v237
      %242 = vst.msk [vmem:[%s143 + $0x10] sm:$0xff] %vm148, %v238
      %243 = vst.msk [vmem:[%s143 + $0x18] sm:$0xff] %vm148, %v239
      %p244 = scmp.lt.s32.totalorder %s13, 1
      %s245 = scalar_select %p244, %s13, 1
      %s246 = smul.addr %s245, 4
      %s247 = smul.addr %s246, 8
      %s248 = scalar_lea.vmem %s2, %s247
      // Predicated region
      $region29: #{tpu_custom_call.1} parent=27 // pred_check
        %p249 = pneg %p78
      $region30: #{tpu_custom_call.1} parent=27 // pred_check_branch
        %251 = sbr.rel (%p249) target = $region32
      $region31: #{tpu_custom_call.1} parent=27 // pred_region
        _
      $region32: #{tpu_custom_call.1} parent=27 // pred_fallthru
        _
    $region28: #{tpu_custom_call.1} parent=5 // pred_fallthru
      _
    %p252 = scmp.le.s32.totalorder 2, %s8
    // Predicated region
    $region33: #{tpu_custom_call.1} parent=5 // pred_check
      %p253 = pneg %p252
    $region34: #{tpu_custom_call.1} parent=5 // pred_check_branch
      %255 = sbr.rel (%p253) target = $region36
    $region35: #{tpu_custom_call.1} parent=5 // pred_region
      %s256 = ssub.s32 %s8, 2
      // Predicated region
      $region37: #{tpu_custom_call.1} parent=35 // pred_check
        %p257 = pneg %p84
      $region38: #{tpu_custom_call.1} parent=35 // pred_check_branch
        %259 = sbr.rel (%p257) target = $region40
      $region39: #{tpu_custom_call.1} parent=35 // pred_region
        %p260 = scmp.lt.s32.totalorder %s14, 1
        %s261 = scalar_select %p260, %s14, 1
        %s262 = smul.addr %s261, 4
        %s263 = smul.addr %s262, 8
        %s264 = scalar_lea.vmem %s2, %s263
      $region40: #{tpu_custom_call.1} parent=35 // pred_fallthru
        _
    $region36: #{tpu_custom_call.1} parent=5 // pred_fallthru
      _
  $region6: #{tpu_custom_call.1} parent=0 // loop_footer
    %s12 = sadd.s32 1, %s8
  $region7: #{tpu_custom_call.1} parent=0 // loop_footer_branch
    %7 = sbr.rel target = $region3
  $region8: #{tpu_custom_call.1} parent=0 // loop_exit
    _

</llo_original>
